<compile_context>
chip_gen: v7x
topology: tpu7x:2x2x1
jax: 0.10.0
libtpu: 0.0.40
codegen_flags: <defaults>
</compile_context>

<pallas_src>
import functools

import jax
import jax.numpy as jnp
from jax.experimental import pallas as pl
from jax.experimental.pallas import tpu as pltpu


def ae_kernel(x_ref,
              w1_ref, b1_ref, w2_ref, b2_ref,
              w3_ref, b3_ref, w4_ref, b4_ref,
              xpred_ref, z_ref):
    """Full AE forward (encoder MLP -> decoder MLP) on one row-packed tile of x.

    Activations arrive/leave in the (low-precision) I/O dtype; matmuls accumulate in
    f32 on the MXU (preferred_element_type), bias add + ReLU are done in f32.
    """
    x = x_ref[...]                                                  # io dtype (e.g. bf16)

    # ---- encoder ----
    h1 = jnp.dot(x, w1_ref[...], preferred_element_type=jnp.float32) + b1_ref[...]
    h1 = jnp.maximum(h1, 0.0).astype(w2_ref.dtype)                  # ReLU (f32) -> bf16
    z_f32 = jnp.dot(h1, w2_ref[...], preferred_element_type=jnp.float32) + b2_ref[...]
    z = z_f32.astype(z_ref.dtype)
    z_ref[...] = z

    # ---- decoder (consumes the same latent precision that is returned) ----
    h2 = jnp.dot(z.astype(w3_ref.dtype), w3_ref[...],
                 preferred_element_type=jnp.float32) + b3_ref[...]
    h2 = jnp.maximum(h2, 0.0).astype(w4_ref.dtype)                  # ReLU (f32) -> bf16
    xp = jnp.dot(h2, w4_ref[...], preferred_element_type=jnp.float32) + b4_ref[...]
    xpred_ref[...] = xp.astype(xpred_ref.dtype)


def _pack_params(params, pack, compute_dtype):
    """Replicate each linear layer block-diagonally so it acts independently on each of
    the `pack` rows folded into one lane-dense (pack*width) row. Biases stay f32."""
    w1, b1, w2, b2, w3, b3, w4, b4 = params
    eye = jnp.eye(pack, dtype=jnp.float32)
    pw = lambda w: jnp.kron(eye, w.astype(jnp.float32)).astype(compute_dtype)
    pb = lambda b: jnp.tile(b.astype(jnp.float32), (1, pack))
    return (pw(w1), pb(b1), pw(w2), pb(b2), pw(w3), pb(b3), pw(w4), pb(b4))


@functools.partial(jax.jit, static_argnames=("tile_rows", "io_dtype"))
def ae_forward(x, params, tile_rows=1024, io_dtype=jnp.bfloat16):
    """x: (B, T, D). Returns (x_pred, z) with shapes (B, T, D) and (B, T, L) in io_dtype."""
    w1, b1, w2, b2, w3, b3, w4, b4 = params
    B, T, D = x.shape
    H = w1.shape[1]
    L = w2.shape[1]
    N = B * T

    # Row-packing factor: fold `pack` consecutive D-wide rows into one lane-dense row.
    pack = 128 // D if (D <= 128 and 128 % D == 0) else 1
    # tile_rows counts un-packed rows; keep it a multiple of 8 * pack (sublane constraint).
    tile_rows = max(int(tile_rows), 8 * pack)
    tile_rows -= tile_rows % (8 * pack)
    tile_p = tile_rows // pack                      # packed rows per grid step

    grid = pl.cdiv(N, tile_rows)
    n_pad = grid * tile_rows

    x2d = x.reshape(N, D).astype(io_dtype)
    if n_pad != N:
        x2d = jnp.pad(x2d, ((0, n_pad - N), (0, 0)))
    x_packed = x2d.reshape(n_pad // pack, pack * D)         # free row-major reshape

    pw1, pb1, pw2, pb2, pw3, pb3, pw4, pb4 = _pack_params(params, pack, io_dtype)

    xp_packed_shape = (n_pad // pack, pack * D)
    z_packed_shape = (n_pad // pack, pack * L)

    # Advisory cost estimate (true work, ignoring padding / block-diag replication).
    itemsize = jnp.dtype(io_dtype).itemsize
    flops = 2 * N * (D * H + H * L + L * H + H * D)
    bytes_accessed = itemsize * (N * (2 * D + L) + D * H + H * L + L * H + H * D) \
        + 4 * (2 * H + L + D)

    full = lambda shape: pl.BlockSpec(shape, lambda i: (0, 0))   # constant index_map: DMA'd once

    out_pred, out_z = pl.pallas_call(
        ae_kernel,
        out_shape=(
            jax.ShapeDtypeStruct(xp_packed_shape, io_dtype),
            jax.ShapeDtypeStruct(z_packed_shape, io_dtype),
        ),
        grid_spec=pltpu.PrefetchScalarGridSpec(
            num_scalar_prefetch=0,
            grid=(grid,),
            in_specs=[
                pl.BlockSpec((tile_p, pack * D), lambda i: (i, 0)),   # x rows (lane-dense)
                full(pw1.shape), full(pb1.shape),                     # enc layer 1
                full(pw2.shape), full(pb2.shape),                     # enc layer 2
                full(pw3.shape), full(pb3.shape),                     # dec layer 1
                full(pw4.shape), full(pb4.shape),                     # dec layer 2
            ],
            out_specs=[
                pl.BlockSpec((tile_p, pack * D), lambda i: (i, 0)),   # x_pred rows
                pl.BlockSpec((tile_p, pack * L), lambda i: (i, 0)),   # z rows
            ],
        ),
        compiler_params=pltpu.CompilerParams(
            dimension_semantics=("parallel",),        # shards the row loop across v7x's 2 TCs
            vmem_limit_bytes=32 * 1024 * 1024,        # explicit; portable to v7x's smaller VMEM
        ),
        cost_estimate=pl.CostEstimate(
            flops=flops, transcendentals=0, bytes_accessed=bytes_accessed),
    )(x_packed, pw1, pb1, pw2, pb2, pw3, pb3, pw4, pb4)

    x_pred = out_pred.reshape(n_pad, D)[:N].reshape(B, T, D)
    z = out_z.reshape(n_pad, L)[:N].reshape(B, T, L)
    return x_pred, z


def init_linear(key, fan_in, fan_out, dtype=jnp.float32):
    """PyTorch nn.Linear default init: U(-1/sqrt(fan_in), 1/sqrt(fan_in)).
    Weight stored transposed as (fan_in, fan_out)."""
    kw, kb = jax.random.split(key)
    bound = 1.0 / (fan_in ** 0.5)
    w = jax.random.uniform(kw, (fan_in, fan_out), dtype, -bound, bound)
    b = jax.random.uniform(kb, (1, fan_out), dtype, -bound, bound)
    return w, b


def reference_forward(x2d, params, io_dtype):
    """Plain-JAX reference mimicking the kernel's precision policy
    (io_dtype activations/weights, f32 accumulation, f32 bias + ReLU)."""
    w1, b1, w2, b2, w3, b3, w4, b4 = params
    q = lambda a: a.astype(io_dtype).astype(jnp.float32)
    xq = q(x2d)
    h1 = jnp.maximum(xq @ q(w1) + b1[0], 0.0)
    z = q(h1) @ q(w2) + b2[0]
    h2 = jnp.maximum(q(z) @ q(w3) + b3[0], 0.0)
    xp = q(h2) @ q(w4) + b4[0]
    return xp, z


if __name__ == "__main__":
    # Small, deterministic example exercising multi-step grid + tail padding + packing:
    # batch=2, seq=300, features=32, hidden=64, latent=16; N=600 rows, tile_rows=256.
    B, T, D, H, L = 2, 300, 32, 64, 16

    key = jax.random.PRNGKey(0)
    kx, k1, k2, k3, k4 = jax.random.split(key, 5)

    x = jax.random.normal(kx, (B, T, D), jnp.float32)

    w1, b1 = init_linear(k1, D, H)   # encoder linear 1
    w2, b2 = init_linear(k2, H, L)   # encoder linear 2 (latent)
    w3, b3 = init_linear(k3, L, H)   # decoder linear 1
    w4, b4 = init_linear(k4, H, D)   # decoder linear 2 (reconstruction)
    params = (w1, b1, w2, b2, w3, b3, w4, b4)

    x_pred, z = ae_forward(x, params, tile_rows=256)
    jax.block_until_ready((x_pred, z))

    # Numerical check against a pure-JAX reference with the same bf16 I/O policy.
    xp_ref, z_ref = reference_forward(x.reshape(B * T, D), params, jnp.bfloat16)
    assert x_pred.shape == (B, T, D) and z.shape == (B, T, L)
    assert jnp.allclose(x_pred.reshape(B * T, D).astype(jnp.float32), xp_ref,
                        atol=2e-2, rtol=2e-2)
    assert jnp.allclose(z.reshape(B * T, L).astype(jnp.float32), z_ref,
                        atol=2e-2, rtol=2e-2)

    print("KERNEL_OK")
</pallas_src>

<mosaic_0001>
module attributes {stable_mosaic.version = 11 : i64} {
  func.func @ae_kernel(%arg0: i32, %arg1: memref<64x128xbf16, #tpu.memory_space<vmem>>, %arg2: memref<128x256xbf16, #tpu.memory_space<vmem>>, %arg3: memref<1x256xf32, #tpu.memory_space<vmem>>, %arg4: memref<256x64xbf16, #tpu.memory_space<vmem>>, %arg5: memref<1x64xf32, #tpu.memory_space<vmem>>, %arg6: memref<64x256xbf16, #tpu.memory_space<vmem>>, %arg7: memref<1x256xf32, #tpu.memory_space<vmem>>, %arg8: memref<256x128xbf16, #tpu.memory_space<vmem>>, %arg9: memref<1x128xf32, #tpu.memory_space<vmem>>, %arg10: memref<64x128xbf16, #tpu.memory_space<vmem>>, %arg11: memref<64x64xbf16, #tpu.memory_space<vmem>>) attributes {dimension_semantics = [#tpu.dimension_semantics<parallel>], iteration_bounds = array<i64: 3>, scalar_prefetch = 0 : i64, scratch_operands = 0 : i64, tpu.core_type = #tpu.core_type<tc>, window_params = [{transform_indices = @transform_0, window_bounds = array<i64: 64, 128>}, {pipeline_mode = #tpu.pipeline_mode<synchronous>, transform_indices = @transform_1, window_bounds = array<i64: 128, 256>}, {pipeline_mode = #tpu.pipeline_mode<synchronous>, transform_indices = @transform_2, window_bounds = array<i64: 1, 256>}, {pipeline_mode = #tpu.pipeline_mode<synchronous>, transform_indices = @transform_3, window_bounds = array<i64: 256, 64>}, {pipeline_mode = #tpu.pipeline_mode<synchronous>, transform_indices = @transform_4, window_bounds = array<i64: 1, 64>}, {pipeline_mode = #tpu.pipeline_mode<synchronous>, transform_indices = @transform_5, window_bounds = array<i64: 64, 256>}, {pipeline_mode = #tpu.pipeline_mode<synchronous>, transform_indices = @transform_6, window_bounds = array<i64: 1, 256>}, {pipeline_mode = #tpu.pipeline_mode<synchronous>, transform_indices = @transform_7, window_bounds = array<i64: 256, 128>}, {pipeline_mode = #tpu.pipeline_mode<synchronous>, transform_indices = @transform_8, window_bounds = array<i64: 1, 128>}, {transform_indices = @transform_9, window_bounds = array<i64: 64, 128>}, {transform_indices = @transform_10, window_bounds = array<i64: 64, 64>}]} {
    %c0 = arith.constant 0 : index
    %c0_0 = arith.constant 0 : index
    %0 = vector.load %arg1[%c0, %c0_0] : memref<64x128xbf16, #tpu.memory_space<vmem>>, vector<64x128xbf16>
    %c0_1 = arith.constant 0 : index
    %c0_2 = arith.constant 0 : index
    %1 = vector.load %arg2[%c0_1, %c0_2] : memref<128x256xbf16, #tpu.memory_space<vmem>>, vector<128x256xbf16>
    %cst = arith.constant dense<0.000000e+00> : vector<64x256xf32>
    %2 = tpu.matmul %0, %1, %cst {dimension_numbers = #tpu.dot_dimension_numbers<[1], [0], [0], [1], [0, 0, 1, 1], [], []>} : vector<64x128xbf16>, vector<128x256xbf16>, vector<64x256xf32> -> vector<64x256xf32>
    %c0_3 = arith.constant 0 : index
    %c0_4 = arith.constant 0 : index
    %3 = vector.load %arg3[%c0_3, %c0_4] : memref<1x256xf32, #tpu.memory_space<vmem>>, vector<1x256xf32>
    %4 = vector.broadcast %3 : vector<1x256xf32> to vector<64x256xf32>
    %5 = arith.addf %2, %4 : vector<64x256xf32>
    %cst_5 = arith.constant 0.000000e+00 : f32
    %6 = vector.broadcast %cst_5 : f32 to vector<64x256xf32>
    %7 = arith.maximumf %5, %6 : vector<64x256xf32>
    %8 = arith.truncf %7 : vector<64x256xf32> to vector<64x256xbf16>
    %c0_6 = arith.constant 0 : index
    %c0_7 = arith.constant 0 : index
    %9 = vector.load %arg4[%c0_6, %c0_7] : memref<256x64xbf16, #tpu.memory_space<vmem>>, vector<256x64xbf16>
    %cst_8 = arith.constant dense<0.000000e+00> : vector<64x64xf32>
    %10 = tpu.matmul %8, %9, %cst_8 {dimension_numbers = #tpu.dot_dimension_numbers<[1], [0], [0], [1], [0, 0, 1, 1], [], []>} : vector<64x256xbf16>, vector<256x64xbf16>, vector<64x64xf32> -> vector<64x64xf32>
    %c0_9 = arith.constant 0 : index
    %c0_10 = arith.constant 0 : index
    %11 = vector.load %arg5[%c0_9, %c0_10] : memref<1x64xf32, #tpu.memory_space<vmem>>, vector<1x64xf32>
    %12 = vector.broadcast %11 : vector<1x64xf32> to vector<64x64xf32>
    %13 = arith.addf %10, %12 : vector<64x64xf32>
    %14 = arith.truncf %13 : vector<64x64xf32> to vector<64x64xbf16>
    %c0_11 = arith.constant 0 : index
    %c0_12 = arith.constant 0 : index
    %15 = vector.load %arg11[%c0_11, %c0_12] : memref<64x64xbf16, #tpu.memory_space<vmem>>, vector<64x64xbf16>
    tpu.vector_store %arg11[%c0_11, %c0_12], %14 {strides = array<i32>} : memref<64x64xbf16, #tpu.memory_space<vmem>>, vector<64x64xbf16>,
    %c0_13 = arith.constant 0 : index
    %c0_14 = arith.constant 0 : index
    %16 = vector.load %arg6[%c0_13, %c0_14] : memref<64x256xbf16, #tpu.memory_space<vmem>>, vector<64x256xbf16>
    %cst_15 = arith.constant dense<0.000000e+00> : vector<64x256xf32>
    %17 = tpu.matmul %14, %16, %cst_15 {dimension_numbers = #tpu.dot_dimension_numbers<[1], [0], [0], [1], [0, 0, 1, 1], [], []>} : vector<64x64xbf16>, vector<64x256xbf16>, vector<64x256xf32> -> vector<64x256xf32>
    %c0_16 = arith.constant 0 : index
    %c0_17 = arith.constant 0 : index
    %18 = vector.load %arg7[%c0_16, %c0_17] : memref<1x256xf32, #tpu.memory_space<vmem>>, vector<1x256xf32>
    %19 = vector.broadcast %18 : vector<1x256xf32> to vector<64x256xf32>
    %20 = arith.addf %17, %19 : vector<64x256xf32>
    %cst_18 = arith.constant 0.000000e+00 : f32
    %21 = vector.broadcast %cst_18 : f32 to vector<64x256xf32>
    %22 = arith.maximumf %20, %21 : vector<64x256xf32>
    %23 = arith.truncf %22 : vector<64x256xf32> to vector<64x256xbf16>
    %c0_19 = arith.constant 0 : index
    %c0_20 = arith.constant 0 : index
    %24 = vector.load %arg8[%c0_19, %c0_20] : memref<256x128xbf16, #tpu.memory_space<vmem>>, vector<256x128xbf16>
    %cst_21 = arith.constant dense<0.000000e+00> : vector<64x128xf32>
    %25 = tpu.matmul %23, %24, %cst_21 {dimension_numbers = #tpu.dot_dimension_numbers<[1], [0], [0], [1], [0, 0, 1, 1], [], []>} : vector<64x256xbf16>, vector<256x128xbf16>, vector<64x128xf32> -> vector<64x128xf32>
    %c0_22 = arith.constant 0 : index
    %c0_23 = arith.constant 0 : index
    %26 = vector.load %arg9[%c0_22, %c0_23] : memref<1x128xf32, #tpu.memory_space<vmem>>, vector<1x128xf32>
    %27 = vector.broadcast %26 : vector<1x128xf32> to vector<64x128xf32>
    %28 = arith.addf %25, %27 : vector<64x128xf32>
    %29 = arith.truncf %28 : vector<64x128xf32> to vector<64x128xbf16>
    %c0_24 = arith.constant 0 : index
    %c0_25 = arith.constant 0 : index
    %30 = vector.load %arg10[%c0_24, %c0_25] : memref<64x128xbf16, #tpu.memory_space<vmem>>, vector<64x128xbf16>
    tpu.vector_store %arg10[%c0_24, %c0_25], %29 {strides = array<i32>} : memref<64x128xbf16, #tpu.memory_space<vmem>>, vector<64x128xbf16>,
    return
  }
  func.func @transform_0(%arg0: i32) -> (i32, i32) {
    %c0_i32 = arith.constant 0 : i32
    %c0_i32_0 = arith.constant 0 : i32
    return %arg0, %c0_i32 : i32, i32
  }
  func.func @transform_1(%arg0: i32) -> (i32, i32) {
    %c0_i32 = arith.constant 0 : i32
    %c0_i32_0 = arith.constant 0 : i32
    %c0_i32_1 = arith.constant 0 : i32
    return %c0_i32, %c0_i32_0 : i32, i32
  }
  func.func @transform_2(%arg0: i32) -> (i32, i32) {
    %c0_i32 = arith.constant 0 : i32
    %c0_i32_0 = arith.constant 0 : i32
    %c0_i32_1 = arith.constant 0 : i32
    return %c0_i32, %c0_i32_0 : i32, i32
  }
  func.func @transform_3(%arg0: i32) -> (i32, i32) {
    %c0_i32 = arith.constant 0 : i32
    %c0_i32_0 = arith.constant 0 : i32
    %c0_i32_1 = arith.constant 0 : i32
    return %c0_i32, %c0_i32_0 : i32, i32
  }
  func.func @transform_4(%arg0: i32) -> (i32, i32) {
    %c0_i32 = arith.constant 0 : i32
    %c0_i32_0 = arith.constant 0 : i32
    %c0_i32_1 = arith.constant 0 : i32
    return %c0_i32, %c0_i32_0 : i32, i32
  }
  func.func @transform_5(%arg0: i32) -> (i32, i32) {
    %c0_i32 = arith.constant 0 : i32
    %c0_i32_0 = arith.constant 0 : i32
    %c0_i32_1 = arith.constant 0 : i32
    return %c0_i32, %c0_i32_0 : i32, i32
  }
  func.func @transform_6(%arg0: i32) -> (i32, i32) {
    %c0_i32 = arith.constant 0 : i32
    %c0_i32_0 = arith.constant 0 : i32
    %c0_i32_1 = arith.constant 0 : i32
    return %c0_i32, %c0_i32_0 : i32, i32
  }
  func.func @transform_7(%arg0: i32) -> (i32, i32) {
    %c0_i32 = arith.constant 0 : i32
    %c0_i32_0 = arith.constant 0 : i32
    %c0_i32_1 = arith.constant 0 : i32
    return %c0_i32, %c0_i32_0 : i32, i32
  }
  func.func @transform_8(%arg0: i32) -> (i32, i32) {
    %c0_i32 = arith.constant 0 : i32
    %c0_i32_0 = arith.constant 0 : i32
    %c0_i32_1 = arith.constant 0 : i32
    return %c0_i32, %c0_i32_0 : i32, i32
  }
  func.func @transform_9(%arg0: i32) -> (i32, i32) {
    %c0_i32 = arith.constant 0 : i32
    %c0_i32_0 = arith.constant 0 : i32
    return %arg0, %c0_i32 : i32, i32
  }
  func.func @transform_10(%arg0: i32) -> (i32, i32) {
    %c0_i32 = arith.constant 0 : i32
    %c0_i32_0 = arith.constant 0 : i32
    return %arg0, %c0_i32 : i32, i32
  }
}

</mosaic_0001>

<llo_original>
// kernel: ae_forward.1
$region0: #{ae_forward.1}
  #allocation0 [shape = 'u32[]', space=smem, size = 0x4, offset = 0x4, fixed_abs, tag = 'smem constant byte address 0x4 - core index']
  #allocation1 [shape = 'u32[144,128]{1,0:T(1,128)}', space=vmem, size = 0x12000, scoped, tag = 'internal scratch']
  %s0 = inlined_call_operand.vmem [shape: bf16[192,128], index: 0, kind: input, shape index: {}]
  %s1 = inlined_call_operand.vmem [shape: bf16[128,256], index: 1, kind: input, shape index: {}]
  %s2 = inlined_call_operand.vmem [shape: f32[1,256], index: 2, kind: input, shape index: {}]
  %s3 = inlined_call_operand.vmem [shape: bf16[256,64], index: 3, kind: input, shape index: {}]
  %s4 = inlined_call_operand.vmem [shape: f32[1,64], index: 4, kind: input, shape index: {}]
  %s5 = inlined_call_operand.vmem [shape: bf16[64,256], index: 5, kind: input, shape index: {}]
  %s6 = inlined_call_operand.vmem [shape: f32[1,256], index: 6, kind: input, shape index: {}]
  %s7 = inlined_call_operand.vmem [shape: bf16[256,128], index: 7, kind: input, shape index: {}]
  %s8 = inlined_call_operand.vmem [shape: f32[1,128], index: 8, kind: input, shape index: {}]
  %s9 = inlined_call_operand.vmem [shape: bf16[192,128], index: 9, kind: output, shape index: {0}]
  %s10 = inlined_call_operand.vmem [shape: bf16[192,64], index: 10, kind: output, shape index: {1}]
  %11 = xla_tuple %s9, %s10
  %s12 = sld [smem:[#allocation0]]
  $region77: #{ae_forward.1} parent=0
    _
  %s14 = ssub.s32 1, %s12
  %s15 = scalar_select 0, %s14, %s12
  loop: start=0, step=1, limit=5
  $region2: #{ae_forward.1} parent=0 // loop_pre_header
    _
  $region3: #{ae_forward.1} parent=0 // loop_header
    %s17 = sphi 0, %s21
    %p18 = scmp.ge.s32.totalorder %s17, 5
    %s27 = sphi 0, %s29
    %s30 = sphi 0, %s27
    %s31 = sphi 0, %s30
    %s47 = sphi 0, %s31
    %s51 = sphi 0, %s51
    %s53 = sphi 0, %s51
    %s54 = sphi 0, %s53
    %s68 = sphi 0, %s54
    %s72 = sphi 0, %s72
    %s74 = sphi 0, %s72
    %s75 = sphi 0, %s74
    %s89 = sphi 0, %s75
    %s93 = sphi 0, %s93
    %s95 = sphi 0, %s93
    %s96 = sphi 0, %s95
    %s110 = sphi 0, %s96
    %s114 = sphi 0, %s114
    %s116 = sphi 0, %s114
    %s117 = sphi 0, %s116
    %s131 = sphi 0, %s117
    %s135 = sphi 0, %s135
    %s137 = sphi 0, %s135
    %s138 = sphi 0, %s137
    %s152 = sphi 0, %s138
    %s156 = sphi 0, %s156
    %s158 = sphi 0, %s156
    %s159 = sphi 0, %s158
    %s173 = sphi 0, %s159
    %s177 = sphi 0, %s177
    %s179 = sphi 0, %s177
    %s180 = sphi 0, %s179
    %s194 = sphi 0, %s180
    %s198 = sphi 0, %s198
    %s200 = sphi 0, %s198
    %s201 = sphi 0, %s200
    %s215 = sphi 0, %s201
    %s221 = sphi 0, %s223
    %s224 = sphi 0, %s221
    %s225 = sphi 0, %s224
    %s241 = sphi 0, %s225
    %s247 = sphi 0, %s249
    %s250 = sphi 0, %s247
    %s251 = sphi 0, %s250
    %s267 = sphi 0, %s251
  $region4: #{ae_forward.1} parent=0 // loop_header_branch
    %20 = sbr.rel (%p18) target = $region8
  $region5: #{ae_forward.1} parent=0 // loop_body
    %s22 = ssub.s32 %s17, 1
    %s23 = ssub.s32 %s17, 2
    %s24 = sadd.s32 %s17, 1
    %s25 = ssub.s32 %s17, %s24
    %p26 = scmp.eq.s32.totalorder %s25, 0
    %s28 = sadd.s32 %s27, 1
    %s29 = scalar_select %p26, %s27, %s28
    %p32 = pneg %p26
    %p33 = scmp.eq.s32.totalorder %s17, 2
    %p34 = por %p32, %p33
    %p35 = scmp.ne.s32.totalorder %s27, %s30
    %p36 = scmp.eq.s32.totalorder %s17, 0
    %p37 = por %p35, %p36
    %p38 = scmp.ne.s32.totalorder %s27, %s30
    %p39 = scmp.eq.s32.totalorder %s22, 2
    %p40 = por %p38, %p39
    %p41 = scmp.ne.s32.totalorder %s30, %s31
    %p42 = scmp.eq.s32.totalorder %s22, 0
    %p43 = por %p41, %p42
    %p44 = scmp.ne.s32.totalorder %s30, %s31
    %p45 = scmp.eq.s32.totalorder %s23, 2
    %p46 = por %p44, %p45
    %p48 = scmp.ne.s32.totalorder %s31, %s47
    %p49 = scmp.eq.s32.totalorder %s23, 0
    %p50 = por %p48, %p49
    %s52 = sadd.s32 %s51, 1
    %p55 = scmp.eq.s32.totalorder %s17, 2
    %p56 = scmp.ne.s32.totalorder %s51, %s53
    %p57 = scmp.eq.s32.totalorder %s17, 0
    %p58 = por %p56, %p57
    %p59 = scmp.ne.s32.totalorder %s51, %s53
    %p60 = scmp.eq.s32.totalorder %s22, 2
    %p61 = por %p59, %p60
    %p62 = scmp.ne.s32.totalorder %s53, %s54
    %p63 = scmp.eq.s32.totalorder %s22, 0
    %p64 = por %p62, %p63
    %p65 = scmp.ne.s32.totalorder %s53, %s54
    %p66 = scmp.eq.s32.totalorder %s23, 2
    %p67 = por %p65, %p66
    %p69 = scmp.ne.s32.totalorder %s54, %s68
    %p70 = scmp.eq.s32.totalorder %s23, 0
    %p71 = por %p69, %p70
    %s73 = sadd.s32 %s72, 1
    %p76 = scmp.eq.s32.totalorder %s17, 2
    %p77 = scmp.ne.s32.totalorder %s72, %s74
    %p78 = scmp.eq.s32.totalorder %s17, 0
    %p79 = por %p77, %p78
    %p80 = scmp.ne.s32.totalorder %s72, %s74
    %p81 = scmp.eq.s32.totalorder %s22, 2
    %p82 = por %p80, %p81
    %p83 = scmp.ne.s32.totalorder %s74, %s75
    %p84 = scmp.eq.s32.totalorder %s22, 0
    %p85 = por %p83, %p84
    %p86 = scmp.ne.s32.totalorder %s74, %s75
    %p87 = scmp.eq.s32.totalorder %s23, 2
    %p88 = por %p86, %p87
    %p90 = scmp.ne.s32.totalorder %s75, %s89
    %p91 = scmp.eq.s32.totalorder %s23, 0
    %p92 = por %p90, %p91
    %s94 = sadd.s32 %s93, 1
    %p97 = scmp.eq.s32.totalorder %s17, 2
    %p98 = scmp.ne.s32.totalorder %s93, %s95
    %p99 = scmp.eq.s32.totalorder %s17, 0
    %p100 = por %p98, %p99
    %p101 = scmp.ne.s32.totalorder %s93, %s95
    %p102 = scmp.eq.s32.totalorder %s22, 2
    %p103 = por %p101, %p102
    %p104 = scmp.ne.s32.totalorder %s95, %s96
    %p105 = scmp.eq.s32.totalorder %s22, 0
    %p106 = por %p104, %p105
    %p107 = scmp.ne.s32.totalorder %s95, %s96
    %p108 = scmp.eq.s32.totalorder %s23, 2
    %p109 = por %p107, %p108
    %p111 = scmp.ne.s32.totalorder %s96, %s110
    %p112 = scmp.eq.s32.totalorder %s23, 0
    %p113 = por %p111, %p112
    %s115 = sadd.s32 %s114, 1
    %p118 = scmp.eq.s32.totalorder %s17, 2
    %p119 = scmp.ne.s32.totalorder %s114, %s116
    %p120 = scmp.eq.s32.totalorder %s17, 0
    %p121 = por %p119, %p120
    %p122 = scmp.ne.s32.totalorder %s114, %s116
    %p123 = scmp.eq.s32.totalorder %s22, 2
    %p124 = por %p122, %p123
    %p125 = scmp.ne.s32.totalorder %s116, %s117
    %p126 = scmp.eq.s32.totalorder %s22, 0
    %p127 = por %p125, %p126
    %p128 = scmp.ne.s32.totalorder %s116, %s117
    %p129 = scmp.eq.s32.totalorder %s23, 2
    %p130 = por %p128, %p129
    %p132 = scmp.ne.s32.totalorder %s117, %s131
    %p133 = scmp.eq.s32.totalorder %s23, 0
    %p134 = por %p132, %p133
    %s136 = sadd.s32 %s135, 1
    %p139 = scmp.eq.s32.totalorder %s17, 2
    %p140 = scmp.ne.s32.totalorder %s135, %s137
    %p141 = scmp.eq.s32.totalorder %s17, 0
    %p142 = por %p140, %p141
    %p143 = scmp.ne.s32.totalorder %s135, %s137
    %p144 = scmp.eq.s32.totalorder %s22, 2
    %p145 = por %p143, %p144
    %p146 = scmp.ne.s32.totalorder %s137, %s138
    %p147 = scmp.eq.s32.totalorder %s22, 0
    %p148 = por %p146, %p147
    %p149 = scmp.ne.s32.totalorder %s137, %s138
    %p150 = scmp.eq.s32.totalorder %s23, 2
    %p151 = por %p149, %p150
    %p153 = scmp.ne.s32.totalorder %s138, %s152
    %p154 = scmp.eq.s32.totalorder %s23, 0
    %p155 = por %p153, %p154
    %s157 = sadd.s32 %s156, 1
    %p160 = scmp.eq.s32.totalorder %s17, 2
    %p161 = scmp.ne.s32.totalorder %s156, %s158
    %p162 = scmp.eq.s32.totalorder %s17, 0
    %p163 = por %p161, %p162
    %p164 = scmp.ne.s32.totalorder %s156, %s158
    %p165 = scmp.eq.s32.totalorder %s22, 2
    %p166 = por %p164, %p165
    %p167 = scmp.ne.s32.totalorder %s158, %s159
    %p168 = scmp.eq.s32.totalorder %s22, 0
    %p169 = por %p167, %p168
    %p170 = scmp.ne.s32.totalorder %s158, %s159
    %p171 = scmp.eq.s32.totalorder %s23, 2
    %p172 = por %p170, %p171
    %p174 = scmp.ne.s32.totalorder %s159, %s173
    %p175 = scmp.eq.s32.totalorder %s23, 0
    %p176 = por %p174, %p175
    %s178 = sadd.s32 %s177, 1
    %p181 = scmp.eq.s32.totalorder %s17, 2
    %p182 = scmp.ne.s32.totalorder %s177, %s179
    %p183 = scmp.eq.s32.totalorder %s17, 0
    %p184 = por %p182, %p183
    %p185 = scmp.ne.s32.totalorder %s177, %s179
    %p186 = scmp.eq.s32.totalorder %s22, 2
    %p187 = por %p185, %p186
    %p188 = scmp.ne.s32.totalorder %s179, %s180
    %p189 = scmp.eq.s32.totalorder %s22, 0
    %p190 = por %p188, %p189
    %p191 = scmp.ne.s32.totalorder %s179, %s180
    %p192 = scmp.eq.s32.totalorder %s23, 2
    %p193 = por %p191, %p192
    %p195 = scmp.ne.s32.totalorder %s180, %s194
    %p196 = scmp.eq.s32.totalorder %s23, 0
    %p197 = por %p195, %p196
    %s199 = sadd.s32 %s198, 1
    %p202 = scmp.eq.s32.totalorder %s17, 2
    %p203 = scmp.ne.s32.totalorder %s198, %s200
    %p204 = scmp.eq.s32.totalorder %s17, 0
    %p205 = por %p203, %p204
    %p206 = scmp.ne.s32.totalorder %s198, %s200
    %p207 = scmp.eq.s32.totalorder %s22, 2
    %p208 = por %p206, %p207
    %p209 = scmp.ne.s32.totalorder %s200, %s201
    %p210 = scmp.eq.s32.totalorder %s22, 0
    %p211 = por %p209, %p210
    %p212 = scmp.ne.s32.totalorder %s200, %s201
    %p213 = scmp.eq.s32.totalorder %s23, 2
    %p214 = por %p212, %p213
    %p216 = scmp.ne.s32.totalorder %s201, %s215
    %p217 = scmp.eq.s32.totalorder %s23, 0
    %p218 = por %p216, %p217
    %s219 = ssub.s32 %s17, %s24
    %p220 = scmp.eq.s32.totalorder %s219, 0
    %s222 = sadd.s32 %s221, 1
    %s223 = scalar_select %p220, %s221, %s222
    %p226 = pneg %p220
    %p227 = scmp.eq.s32.totalorder %s17, 2
    %p228 = por %p226, %p227
    %p229 = scmp.ne.s32.totalorder %s221, %s224
    %p230 = scmp.eq.s32.totalorder %s17, 0
    %p231 = por %p229, %p230
    %p232 = scmp.ne.s32.totalorder %s221, %s224
    %p233 = scmp.eq.s32.totalorder %s22, 2
    %p234 = por %p232, %p233
    %p235 = scmp.ne.s32.totalorder %s224, %s225
    %p236 = scmp.eq.s32.totalorder %s22, 0
    %p237 = por %p235, %p236
    %p238 = scmp.ne.s32.totalorder %s224, %s225
    %p239 = scmp.eq.s32.totalorder %s23, 2
    %p240 = por %p238, %p239
    %p242 = scmp.ne.s32.totalorder %s225, %s241
    %p243 = scmp.eq.s32.totalorder %s23, 0
    %p244 = por %p242, %p243
    %s245 = ssub.s32 %s17, %s24
    %p246 = scmp.eq.s32.totalorder %s245, 0
    %s248 = sadd.s32 %s247, 1
    %s249 = scalar_select %p246, %s247, %s248
    %p252 = pneg %p246
    %p253 = scmp.eq.s32.totalorder %s17, 2
    %p254 = por %p252, %p253
    %p255 = scmp.ne.s32.totalorder %s247, %s250
    %p256 = scmp.eq.s32.totalorder %s17, 0
    %p257 = por %p255, %p256
    %p258 = scmp.ne.s32.totalorder %s247, %s250
    %p259 = scmp.eq.s32.totalorder %s22, 2
    %p260 = por %p258, %p259
    %p261 = scmp.ne.s32.totalorder %s250, %s251
    %p262 = scmp.eq.s32.totalorder %s22, 0
    %p263 = por %p261, %p262
    %p264 = scmp.ne.s32.totalorder %s250, %s251
    %p265 = scmp.eq.s32.totalorder %s23, 2
    %p266 = por %p264, %p265
    %p268 = scmp.ne.s32.totalorder %s251, %s267
    %p269 = scmp.eq.s32.totalorder %s23, 0
    %p270 = por %p268, %p269
    %p271 = scmp.le.s32.totalorder 1, %s17
    %p272 = scmp.lt.s32.totalorder %s17, 4
    %p273 = pnand %p271, %p272
    %p274 = pneg %p273
    // Predicated region
    $region9: #{ae_forward.1} parent=5 // pred_check
      _
    $region10: #{ae_forward.1} parent=5 // pred_check_branch
      %276 = sbr.rel (%p273) target = $region12
    $region11: #{ae_forward.1} parent=5 // pred_region
      %s277 = ssub.s32 %s17, 1
      // Predicated region
      $region13: #{ae_forward.1} parent=11 // pred_check
        %p278 = pneg %p64
      $region14: #{ae_forward.1} parent=11 // pred_check_branch
        %280 = sbr.rel (%p278) target = $region16
      $region15: #{ae_forward.1} parent=11 // pred_region
        _
      $region16: #{ae_forward.1} parent=11 // pred_fallthru
        _
      // Predicated region
      $region17: #{ae_forward.1} parent=11 // pred_check
        %p281 = pneg %p85
      $region18: #{ae_forward.1} parent=11 // pred_check_branch
        %283 = sbr.rel (%p281) target = $region20
      $region19: #{ae_forward.1} parent=11 // pred_region
        _
      $region20: #{ae_forward.1} parent=11 // pred_fallthru
        _
      // Predicated region
      $region21: #{ae_forward.1} parent=11 // pred_check
        %p284 = pneg %p106
      $region22: #{ae_forward.1} parent=11 // pred_check_branch
        %286 = sbr.rel (%p284) target = $region24
      $region23: #{ae_forward.1} parent=11 // pred_region
        _
      $region24: #{ae_forward.1} parent=11 // pred_fallthru
        _
      // Predicated region
      $region25: #{ae_forward.1} parent=11 // pred_check
        %p287 = pneg %p127
      $region26: #{ae_forward.1} parent=11 // pred_check_branch
        %289 = sbr.rel (%p287) target = $region28
      $region27: #{ae_forward.1} parent=11 // pred_region
        _
      $region28: #{ae_forward.1} parent=11 // pred_fallthru
        _
      // Predicated region
      $region29: #{ae_forward.1} parent=11 // pred_check
        %p290 = pneg %p148
      $region30: #{ae_forward.1} parent=11 // pred_check_branch
        %292 = sbr.rel (%p290) target = $region32
      $region31: #{ae_forward.1} parent=11 // pred_region
        _
      $region32: #{ae_forward.1} parent=11 // pred_fallthru
        _
      // Predicated region
      $region33: #{ae_forward.1} parent=11 // pred_check
        %p293 = pneg %p169
      $region34: #{ae_forward.1} parent=11 // pred_check_branch
        %295 = sbr.rel (%p293) target = $region36
      $region35: #{ae_forward.1} parent=11 // pred_region
        _
      $region36: #{ae_forward.1} parent=11 // pred_fallthru
        _
      // Predicated region
      $region37: #{ae_forward.1} parent=11 // pred_check
        %p296 = pneg %p190
      $region38: #{ae_forward.1} parent=11 // pred_check_branch
        %298 = sbr.rel (%p296) target = $region40
      $region39: #{ae_forward.1} parent=11 // pred_region
        _
      $region40: #{ae_forward.1} parent=11 // pred_fallthru
        _
      // Predicated region
      $region41: #{ae_forward.1} parent=11 // pred_check
        %p299 = pneg %p211
      $region42: #{ae_forward.1} parent=11 // pred_check_branch
        %301 = sbr.rel (%p299) target = $region44
      $region43: #{ae_forward.1} parent=11 // pred_region
        _
      $region44: #{ae_forward.1} parent=11 // pred_fallthru
        _
    $region12: #{ae_forward.1} parent=5 // pred_fallthru
      _
    %p302 = scmp.lt.s32.totalorder %s17, 3
    // Predicated region
    $region45: #{ae_forward.1} parent=5 // pred_check
      %p303 = pneg %p302
    $region46: #{ae_forward.1} parent=5 // pred_check_branch
      %305 = sbr.rel (%p303) target = $region48
    $region47: #{ae_forward.1} parent=5 // pred_region
      // Predicated region
      $region49: #{ae_forward.1} parent=47 // pred_check
        %p306 = pneg %p37
      $region50: #{ae_forward.1} parent=47 // pred_check_branch
        %308 = sbr.rel (%p306) target = $region52
      $region51: #{ae_forward.1} parent=47 // pred_region
        %s309 = smul.u32 8, %s17
        %p310 = scmp.lt.s32.totalorder %s309, 23
        %s311 = scalar_select %p310, %s309, 23
        %s312 = smul.addr %s311, 4
        %s313 = scalar_lea.vmem %s0, %s312
        %s314 = smul.u32 8, %s17
      $region52: #{ae_forward.1} parent=47 // pred_fallthru
        _
    $region48: #{ae_forward.1} parent=5 // pred_fallthru
      _
    %p315 = scmp.le.s32.totalorder 1, %s17
    %p316 = scmp.lt.s32.totalorder %s17, 4
    %p317 = pnand %p315, %p316
    %p318 = pneg %p317
    // Predicated region
    $region53: #{ae_forward.1} parent=5 // pred_check
      _
    $region54: #{ae_forward.1} parent=5 // pred_check_branch
      %320 = sbr.rel (%p317) target = $region56
    $region55: #{ae_forward.1} parent=5 // pred_region
      %s321 = ssub.s32 %s17, 1
      %s322 = smul.u32 8, %s22
      %p323 = scmp.lt.s32.totalorder %s322, 23
      %s324 = scalar_select %p323, %s322, 23
      %s325 = smul.addr %s324, 4
      %s326 = scalar_lea.vmem %s0, %s325
      %p327 = pneg %p43
      %p328 = pneg %p40
      %p329 = pneg %p64
      %p330 = pneg %p61
      %p331 = pneg %p85
      %p332 = pneg %p82
      %p333 = pneg %p106
      %p334 = pneg %p103
      %p335 = pneg %p127
      %p336 = pneg %p124
      %p337 = pneg %p148
      %p338 = pneg %p145
      %p339 = pneg %p169
      %p340 = pneg %p166
      %p341 = pneg %p190
      %p342 = pneg %p187
      %p343 = pneg %p211
      %p344 = pneg %p208
      %p345 = pneg %p237
      %p346 = pneg %p234
      %s347 = smul.u32 8, %s22
      %p348 = scmp.lt.s32.totalorder %s347, 23
      %s349 = scalar_select %p348, %s347, 23
      %s350 = smul.addr %s349, 4
      %s351 = scalar_lea.vmem %s9, %s350
      %p352 = pneg %p263
      %p353 = pneg %p260
      %s354 = smul.u32 8, %s22
      %p355 = scmp.lt.s32.totalorder %s354, 23
      %s356 = scalar_select %p355, %s354, 23
      %s357 = smul.addr %s356, 4
      %s358 = scalar_lea.vmem %s10, %s357
      %s359 = smul.u32 8, %s22
      %p360 = scmp.lt.s32.totalorder %s359, 23
      %s361 = scalar_select %p360, %s359, 23
      %s362 = smul.addr %s361, 4
      %s363 = scalar_lea.vmem %s0, %s362
      %s364 = smul.u32 8, %s22
      %s365 = smul.u32 8, %s22
      %p366 = scmp.lt.s32.totalorder %s365, 23
      %s367 = scalar_select %p366, %s365, 23
      %s368 = smul.addr %s367, 4
      %s369 = scalar_lea.vmem %s9, %s368
      %s370 = smul.u32 8, %s22
      %s371 = smul.u32 8, %s22
      %p372 = scmp.lt.s32.totalorder %s371, 23
      %s373 = scalar_select %p372, %s371, 23
      %s374 = smul.addr %s373, 4
      %s375 = scalar_lea.vmem %s10, %s374
      %s376 = smul.u32 8, %s22
      %v378 = vld [vmem:[%s363] sm:$0xf]
      %v379 = vld [vmem:[%s363 + $0x4] sm:$0xf]
      %v380 = vld [vmem:[%s363 + $0x8] sm:$0xf]
      %v381 = vld [vmem:[%s363 + $0xc] sm:$0xf]
      %v382 = vld [vmem:[%s363 + $0x10] sm:$0xf]
      %v383 = vld [vmem:[%s363 + $0x14] sm:$0xf]
      %v384 = vld [vmem:[%s363 + $0x18] sm:$0xf]
      %v385 = vld [vmem:[%s363 + $0x1c] sm:$0xf]
      %v386 = vld [vmem:[%s1] sm:$0xff]
      %v387 = vld [vmem:[%s1 + $0x8] sm:$0xff]
      %v388 = vld [vmem:[%s1 + $0x10] sm:$0xff]
      %v389 = vld [vmem:[%s1 + $0x18] sm:$0xff]
      %v390 = vld [vmem:[%s1 + $0x20] sm:$0xff]
      %v391 = vld [vmem:[%s1 + $0x28] sm:$0xff]
      %v392 = vld [vmem:[%s1 + $0x30] sm:$0xff]
      %v393 = vld [vmem:[%s1 + $0x38] sm:$0xff]
      %v394 = vld [vmem:[%s1 + $0x40] sm:$0xff]
      %v395 = vld [vmem:[%s1 + $0x48] sm:$0xff]
      %v396 = vld [vmem:[%s1 + $0x50] sm:$0xff]
      %v397 = vld [vmem:[%s1 + $0x58] sm:$0xff]
      %v398 = vld [vmem:[%s1 + $0x60] sm:$0xff]
      %v399 = vld [vmem:[%s1 + $0x68] sm:$0xff]
      %v400 = vld [vmem:[%s1 + $0x70] sm:$0xff]
      %v401 = vld [vmem:[%s1 + $0x78] sm:$0xff]
      %v402 = vld [vmem:[%s2] sm:$0x3]
      %v404 = vlaneseq
      %v405 = vshrl.u32 %v404, 7
      %v406 = vsub.s32 0, %v405
      %v407 = vrot.slane %v402, %v406
      %v408 = vlaneseq
      %v409 = vshrl.u32 %v408, 7
      %v410 = vsub.s32 1, %v409
      %v411 = vrot.slane %v402, %v410
      %v422 = vunpack.c.l.b16 %v378
      %v423 = vunpack.c.l.b16 %v379
      %v424 = vunpack.c.l.b16 %v380
      %v425 = vunpack.c.l.b16 %v381
      %v426 = vunpack.c.l.b16 %v382
      %v427 = vunpack.c.l.b16 %v383
      %v428 = vunpack.c.l.b16 %v384
      %v429 = vunpack.c.l.b16 %v385
      %v430 = vpack.c.b16 %v423, %v422
      %v431 = vpack.c.b16 %v425, %v424
      %v432 = vpack.c.b16 %v427, %v426
      %v433 = vpack.c.b16 %v429, %v428
      %v454 = vunpack.c.l.b16 %v386
      %v455 = vunpack.c.h.b16 %v386
      %v456 = vunpack.c.l.b16 %v387
      %v457 = vunpack.c.h.b16 %v387
      %v458 = vunpack.c.l.b16 %v388
      %v459 = vunpack.c.h.b16 %v388
      %v460 = vunpack.c.l.b16 %v389
      %v461 = vunpack.c.h.b16 %v389
      %v462 = vunpack.c.l.b16 %v390
      %v463 = vunpack.c.h.b16 %v390
      %v464 = vunpack.c.l.b16 %v391
      %v465 = vunpack.c.h.b16 %v391
      %v466 = vunpack.c.l.b16 %v392
      %v467 = vunpack.c.h.b16 %v392
      %v468 = vunpack.c.l.b16 %v393
      %v469 = vunpack.c.h.b16 %v393
      %v470 = vunpack.c.l.b16 %v394
      %v471 = vunpack.c.h.b16 %v394
      %v472 = vunpack.c.l.b16 %v395
      %v473 = vunpack.c.h.b16 %v395
      %v474 = vunpack.c.l.b16 %v396
      %v475 = vunpack.c.h.b16 %v396
      %v476 = vunpack.c.l.b16 %v397
      %v477 = vunpack.c.h.b16 %v397
      %v478 = vunpack.c.l.b16 %v398
      %v479 = vunpack.c.h.b16 %v398
      %v480 = vunpack.c.l.b16 %v399
      %v481 = vunpack.c.h.b16 %v399
      %v482 = vunpack.c.l.b16 %v400
      %v483 = vunpack.c.h.b16 %v400
      %v484 = vunpack.c.l.b16 %v401
      %v485 = vunpack.c.h.b16 %v401
      %v486 = vpack.c.b16 %v456, %v454
      %v487 = vpack.c.b16 %v457, %v455
      %v488 = vpack.c.b16 %v460, %v458
      %v489 = vpack.c.b16 %v461, %v459
      %v490 = vpack.c.b16 %v464, %v462
      %v491 = vpack.c.b16 %v465, %v463
      %v492 = vpack.c.b16 %v468, %v466
      %v493 = vpack.c.b16 %v469, %v467
      %v494 = vpack.c.b16 %v472, %v470
      %v495 = vpack.c.b16 %v473, %v471
      %v496 = vpack.c.b16 %v476, %v474
      %v497 = vpack.c.b16 %v477, %v475
      %v498 = vpack.c.b16 %v480, %v478
      %v499 = vpack.c.b16 %v481, %v479
      %v500 = vpack.c.b16 %v484, %v482
      %v501 = vpack.c.b16 %v485, %v483
      %518 = vmatprep.subr.bf16.mxu0 %v487
      %519 = vmatpush1.bf16.msra.mxu0 %v486
      %520 = vmatprep.subr.bf16.mxu0 %v489
      %521 = vmatpush1.bf16.msra.mxu0 %v488
      %522 = vmatprep.subr.bf16.mxu0 %v491
      %523 = vmatpush1.bf16.msra.mxu0 %v490
      %524 = vmatprep.subr.bf16.mxu0 %v493
      %525 = vmatpush1.bf16.msra.mxu0 %v492
      %526 = vmatprep.subr.bf16.mxu0 %v495
      %527 = vmatpush1.bf16.msra.mxu0 %v494
      %528 = vmatprep.subr.bf16.mxu0 %v497
      %529 = vmatpush1.bf16.msra.mxu0 %v496
      %530 = vmatprep.subr.bf16.mxu0 %v499
      %531 = vmatpush1.bf16.msra.mxu0 %v498
      %532 = vmatprep.subr.bf16.mxu0 %v501
      %533 = vmatpush1.bf16.msra.mxu0 %v500
      %534 = vmatprep.subr.bf16.mxu0 0
      %535 = vmatpush1.bf16.msra.mxu0 0
      %536 = vmatprep.subr.bf16.mxu0 0
      %537 = vmatpush1.bf16.msra.mxu0 0
      %538 = vmatprep.subr.bf16.mxu0 0
      %539 = vmatpush1.bf16.msra.mxu0 0
      %540 = vmatprep.subr.bf16.mxu0 0
      %541 = vmatpush1.bf16.msra.mxu0 0
      %542 = vmatprep.subr.bf16.mxu0 0
      %543 = vmatpush1.bf16.msra.mxu0 0
      %544 = vmatprep.subr.bf16.mxu0 0
      %545 = vmatpush1.bf16.msra.mxu0 0
      %546 = vmatprep.subr.bf16.mxu0 0
      %547 = vmatpush1.bf16.msra.mxu0 0
      %548 = vmatprep.subr.bf16.mxu0 0
      %549 = vmatpush1.bf16.msra.mxu0 0
      %550 = vmatprep.mubr.bf16.mxu0 0
      %551 = vmatmul.mubr.bf16.gmra.mrb[0].mxu0 %v430
      %v552 = vpop.f32.mrb[0].mxu0
      %v553 = vadd.f32 %v407, %v552
      %v554 = vpop.f32.mrb[0].mxu0
      %v555 = vadd.f32 %v411, %v554
      %v556 = vpop.f32.mrb[0].mxu0
      %v557 = vadd.f32 %v407, %v556
      %v558 = vpop.f32.mrb[0].mxu0
      %v559 = vadd.f32 %v411, %v558
      %560 = vmatprep.mubr.bf16.mxu0 0
      %561 = vmatmul.mubr.bf16.gmra.mrb[0].mxu0 %v431
      %v562 = vpop.f32.mrb[0].mxu0
      %v563 = vadd.f32 %v407, %v562
      %v564 = vpop.f32.mrb[0].mxu0
      %v565 = vadd.f32 %v411, %v564
      %v566 = vpop.f32.mrb[0].mxu0
      %v567 = vadd.f32 %v407, %v566
      %v568 = vpop.f32.mrb[0].mxu0
      %v569 = vadd.f32 %v411, %v568
      %570 = vmatprep.mubr.bf16.mxu0 0
      %571 = vmatmul.mubr.bf16.gmra.mrb[0].mxu0 %v432
      %v572 = vpop.f32.mrb[0].mxu0
      %v573 = vadd.f32 %v407, %v572
      %v574 = vpop.f32.mrb[0].mxu0
      %v575 = vadd.f32 %v411, %v574
      %v576 = vpop.f32.mrb[0].mxu0
      %v577 = vadd.f32 %v407, %v576
      %v578 = vpop.f32.mrb[0].mxu0
      %v579 = vadd.f32 %v411, %v578
      %580 = vmatprep.mubr.bf16.mxu0 0
      %581 = vmatmul.mubr.bf16.gmra.mrb[0].mxu0 %v433
      %v582 = vpop.f32.mrb[0].mxu0
      %v583 = vadd.f32 %v407, %v582
      %v584 = vpop.f32.mrb[0].mxu0
      %v585 = vadd.f32 %v411, %v584
      %v586 = vpop.f32.mrb[0].mxu0
      %v587 = vadd.f32 %v407, %v586
      %v588 = vpop.f32.mrb[0].mxu0
      %v589 = vadd.f32 %v411, %v588
      %590 = vdwg.mxu0
      %v591 = vmax.f32 %v553, 0.0
      %v592 = vmax.f32 %v555, 0.0
      %v593 = vmax.f32 %v557, 0.0
      %v594 = vmax.f32 %v559, 0.0
      %v595 = vmax.f32 %v563, 0.0
      %v596 = vmax.f32 %v565, 0.0
      %v597 = vmax.f32 %v567, 0.0
      %v598 = vmax.f32 %v569, 0.0
      %v599 = vmax.f32 %v573, 0.0
      %v600 = vmax.f32 %v575, 0.0
      %v601 = vmax.f32 %v577, 0.0
      %v602 = vmax.f32 %v579, 0.0
      %v603 = vmax.f32 %v583, 0.0
      %v604 = vmax.f32 %v585, 0.0
      %v605 = vmax.f32 %v587, 0.0
      %v606 = vmax.f32 %v589, 0.0
      %v607 = vpack.c.bf16 %v593, %v591
      %v608 = vpack.c.bf16 %v594, %v592
      %v609 = vpack.c.bf16 %v597, %v595
      %v610 = vpack.c.bf16 %v598, %v596
      %v611 = vpack.c.bf16 %v601, %v599
      %v612 = vpack.c.bf16 %v602, %v600
      %v613 = vpack.c.bf16 %v605, %v603
      %v614 = vpack.c.bf16 %v606, %v604
      %v615 = vld [vmem:[%s3] sm:$0xf]
      %v616 = vld [vmem:[%s3 + $0x4] sm:$0xf]
      %v617 = vld [vmem:[%s3 + $0x8] sm:$0xf]
      %v618 = vld [vmem:[%s3 + $0xc] sm:$0xf]
      %v619 = vld [vmem:[%s3 + $0x10] sm:$0xf]
      %v620 = vld [vmem:[%s3 + $0x14] sm:$0xf]
      %v621 = vld [vmem:[%s3 + $0x18] sm:$0xf]
      %v622 = vld [vmem:[%s3 + $0x1c] sm:$0xf]
      %v623 = vld [vmem:[%s3 + $0x20] sm:$0xf]
      %v624 = vld [vmem:[%s3 + $0x24] sm:$0xf]
      %v625 = vld [vmem:[%s3 + $0x28] sm:$0xf]
      %v626 = vld [vmem:[%s3 + $0x2c] sm:$0xf]
      %v627 = vld [vmem:[%s3 + $0x30] sm:$0xf]
      %v628 = vld [vmem:[%s3 + $0x34] sm:$0xf]
      %v629 = vld [vmem:[%s3 + $0x38] sm:$0xf]
      %v630 = vld [vmem:[%s3 + $0x3c] sm:$0xf]
      %v631 = vld [vmem:[%s3 + $0x40] sm:$0xf]
      %v632 = vld [vmem:[%s3 + $0x44] sm:$0xf]
      %v633 = vld [vmem:[%s3 + $0x48] sm:$0xf]
      %v634 = vld [vmem:[%s3 + $0x4c] sm:$0xf]
      %v635 = vld [vmem:[%s3 + $0x50] sm:$0xf]
      %v636 = vld [vmem:[%s3 + $0x54] sm:$0xf]
      %v637 = vld [vmem:[%s3 + $0x58] sm:$0xf]
      %v638 = vld [vmem:[%s3 + $0x5c] sm:$0xf]
      %v639 = vld [vmem:[%s3 + $0x60] sm:$0xf]
      %v640 = vld [vmem:[%s3 + $0x64] sm:$0xf]
      %v641 = vld [vmem:[%s3 + $0x68] sm:$0xf]
      %v642 = vld [vmem:[%s3 + $0x6c] sm:$0xf]
      %v643 = vld [vmem:[%s3 + $0x70] sm:$0xf]
      %v644 = vld [vmem:[%s3 + $0x74] sm:$0xf]
      %v645 = vld [vmem:[%s3 + $0x78] sm:$0xf]
      %v646 = vld [vmem:[%s3 + $0x7c] sm:$0xf]
      %v647 = vld [vmem:[%s4] sm:$0x1]
      %v649 = vlaneseq
      %v650 = vshrl.u32 %v649, 7
      %v651 = vsub.s32 0, %v650
      %v652 = vrot.slane %v647, %v651
      %v686 = vunpack.c.l.b16 %v615
      %v687 = vunpack.c.l.b16 %v616
      %v688 = vunpack.c.l.b16 %v617
      %v689 = vunpack.c.l.b16 %v618
      %v690 = vunpack.c.l.b16 %v619
      %v691 = vunpack.c.l.b16 %v620
      %v692 = vunpack.c.l.b16 %v621
      %v693 = vunpack.c.l.b16 %v622
      %v694 = vunpack.c.l.b16 %v623
      %v695 = vunpack.c.l.b16 %v624
      %v696 = vunpack.c.l.b16 %v625
      %v697 = vunpack.c.l.b16 %v626
      %v698 = vunpack.c.l.b16 %v627
      %v699 = vunpack.c.l.b16 %v628
      %v700 = vunpack.c.l.b16 %v629
      %v701 = vunpack.c.l.b16 %v630
      %v702 = vunpack.c.l.b16 %v631
      %v703 = vunpack.c.l.b16 %v632
      %v704 = vunpack.c.l.b16 %v633
      %v705 = vunpack.c.l.b16 %v634
      %v706 = vunpack.c.l.b16 %v635
      %v707 = vunpack.c.l.b16 %v636
      %v708 = vunpack.c.l.b16 %v637
      %v709 = vunpack.c.l.b16 %v638
      %v710 = vunpack.c.l.b16 %v639
      %v711 = vunpack.c.l.b16 %v640
      %v712 = vunpack.c.l.b16 %v641
      %v713 = vunpack.c.l.b16 %v642
      %v714 = vunpack.c.l.b16 %v643
      %v715 = vunpack.c.l.b16 %v644
      %v716 = vunpack.c.l.b16 %v645
      %v717 = vunpack.c.l.b16 %v646
      %v718 = vpack.c.b16 %v687, %v686
      %v719 = vpack.c.b16 %v689, %v688
      %v720 = vpack.c.b16 %v691, %v690
      %v721 = vpack.c.b16 %v693, %v692
      %v722 = vpack.c.b16 %v695, %v694
      %v723 = vpack.c.b16 %v697, %v696
      %v724 = vpack.c.b16 %v699, %v698
      %v725 = vpack.c.b16 %v701, %v700
      %v726 = vpack.c.b16 %v703, %v702
      %v727 = vpack.c.b16 %v705, %v704
      %v728 = vpack.c.b16 %v707, %v706
      %v729 = vpack.c.b16 %v709, %v708
      %v730 = vpack.c.b16 %v711, %v710
      %v731 = vpack.c.b16 %v713, %v712
      %v732 = vpack.c.b16 %v715, %v714
      %v733 = vpack.c.b16 %v717, %v716
      %750 = vmatprep.subr.bf16.mxu0 0
      %751 = vmatpush1.bf16.msra.mxu0 %v718
      %752 = vmatprep.subr.bf16.mxu0 0
      %753 = vmatpush1.bf16.msra.mxu0 %v719
      %754 = vmatprep.subr.bf16.mxu0 0
      %755 = vmatpush1.bf16.msra.mxu0 %v720
      %756 = vmatprep.subr.bf16.mxu0 0
      %757 = vmatpush1.bf16.msra.mxu0 %v721
      %758 = vmatprep.subr.bf16.mxu0 0
      %759 = vmatpush1.bf16.msra.mxu0 %v722
      %760 = vmatprep.subr.bf16.mxu0 0
      %761 = vmatpush1.bf16.msra.mxu0 %v723
      %762 = vmatprep.subr.bf16.mxu0 0
      %763 = vmatpush1.bf16.msra.mxu0 %v724
      %764 = vmatprep.subr.bf16.mxu0 0
      %765 = vmatpush1.bf16.msra.mxu0 %v725
      %766 = vmatprep.subr.bf16.mxu0 0
      %767 = vmatpush1.bf16.msra.mxu0 %v726
      %768 = vmatprep.subr.bf16.mxu0 0
      %769 = vmatpush1.bf16.msra.mxu0 %v727
      %770 = vmatprep.subr.bf16.mxu0 0
      %771 = vmatpush1.bf16.msra.mxu0 %v728
      %772 = vmatprep.subr.bf16.mxu0 0
      %773 = vmatpush1.bf16.msra.mxu0 %v729
      %774 = vmatprep.subr.bf16.mxu0 0
      %775 = vmatpush1.bf16.msra.mxu0 %v730
      %776 = vmatprep.subr.bf16.mxu0 0
      %777 = vmatpush1.bf16.msra.mxu0 %v731
      %778 = vmatprep.subr.bf16.mxu0 0
      %779 = vmatpush1.bf16.msra.mxu0 %v732
      %780 = vmatprep.subr.bf16.mxu0 0
      %781 = vmatpush1.bf16.msra.mxu0 %v733
      %782 = vmatprep.mubr.bf16.mxu0 %v608
      %783 = vmatmul.mubr.bf16.gmra.mrb[0].mxu0 %v607
      %v784 = vpop.f32.mrb[0].mxu0
      %v785 = vadd.f32 %v652, %v784
      %v786 = vpop.f32.mrb[0].mxu0
      %v787 = vpop.f32.mrb[0].mxu0
      %v788 = vadd.f32 %v652, %v787
      %v789 = vpop.f32.mrb[0].mxu0
      %790 = vmatprep.mubr.bf16.mxu0 %v610
      %791 = vmatmul.mubr.bf16.gmra.mrb[0].mxu0 %v609
      %v792 = vpop.f32.mrb[0].mxu0
      %v793 = vadd.f32 %v652, %v792
      %v794 = vpop.f32.mrb[0].mxu0
      %v795 = vpop.f32.mrb[0].mxu0
      %v796 = vadd.f32 %v652, %v795
      %v797 = vpop.f32.mrb[0].mxu0
      %798 = vmatprep.mubr.bf16.mxu0 %v612
      %799 = vmatmul.mubr.bf16.gmra.mrb[0].mxu0 %v611
      %v800 = vpop.f32.mrb[0].mxu0
      %v801 = vadd.f32 %v652, %v800
      %v802 = vpop.f32.mrb[0].mxu0
      %v803 = vpop.f32.mrb[0].mxu0
      %v804 = vadd.f32 %v652, %v803
      %v805 = vpop.f32.mrb[0].mxu0
      %806 = vmatprep.mubr.bf16.mxu0 %v614
      %807 = vmatmul.mubr.bf16.gmra.mrb[0].mxu0 %v613
      %v808 = vpop.f32.mrb[0].mxu0
      %v809 = vadd.f32 %v652, %v808
      %v810 = vpop.f32.mrb[0].mxu0
      %v811 = vpop.f32.mrb[0].mxu0
      %v812 = vadd.f32 %v652, %v811
      %v813 = vpop.f32.mrb[0].mxu0
      %814 = vdwg.mxu0
      %v815 = vpack.c.bf16 %v788, %v785
      %v816 = vpack.c.bf16 %v796, %v793
      %v817 = vpack.c.bf16 %v804, %v801
      %v818 = vpack.c.bf16 %v812, %v809
      %v823 = vunpack.c.l.b16 %v815
      %v824 = vunpack.c.h.b16 %v815
      %v825 = vunpack.c.l.b16 %v816
      %v826 = vunpack.c.h.b16 %v816
      %v827 = vunpack.c.l.b16 %v817
      %v828 = vunpack.c.h.b16 %v817
      %v829 = vunpack.c.l.b16 %v818
      %v830 = vunpack.c.h.b16 %v818
      %v831 = vpack.c.b16 %v823, %v823
      %v832 = vpack.c.b16 %v824, %v824
      %v833 = vpack.c.b16 %v825, %v825
      %v834 = vpack.c.b16 %v826, %v826
      %v835 = vpack.c.b16 %v827, %v827
      %v836 = vpack.c.b16 %v828, %v828
      %v837 = vpack.c.b16 %v829, %v829
      %v838 = vpack.c.b16 %v830, %v830
      %vm847 = vcmask 519168
      %848 = vst.msk [vmem:[%s375] sm:$0xf] %vm847, %v831
      %849 = vst.msk [vmem:[%s375 + $0x4] sm:$0xf] %vm847, %v832
      %850 = vst.msk [vmem:[%s375 + $0x8] sm:$0xf] %vm847, %v833
      %851 = vst.msk [vmem:[%s375 + $0xc] sm:$0xf] %vm847, %v834
      %852 = vst.msk [vmem:[%s375 + $0x10] sm:$0xf] %vm847, %v835
      %853 = vst.msk [vmem:[%s375 + $0x14] sm:$0xf] %vm847, %v836
      %854 = vst.msk [vmem:[%s375 + $0x18] sm:$0xf] %vm847, %v837
      %855 = vst.msk [vmem:[%s375 + $0x1c] sm:$0xf] %vm847, %v838
      %v856 = vld [vmem:[%s5] sm:$0xff]
      %v857 = vld [vmem:[%s5 + $0x8] sm:$0xff]
      %v858 = vld [vmem:[%s5 + $0x10] sm:$0xff]
      %v859 = vld [vmem:[%s5 + $0x18] sm:$0xff]
      %v860 = vld [vmem:[%s5 + $0x20] sm:$0xff]
      %v861 = vld [vmem:[%s5 + $0x28] sm:$0xff]
      %v862 = vld [vmem:[%s5 + $0x30] sm:$0xff]
      %v863 = vld [vmem:[%s5 + $0x38] sm:$0xff]
      %v864 = vld [vmem:[%s6] sm:$0x3]
      %v866 = vlaneseq
      %v867 = vshrl.u32 %v866, 7
      %v868 = vsub.s32 0, %v867
      %v869 = vrot.slane %v864, %v868
      %v870 = vlaneseq
      %v871 = vshrl.u32 %v870, 7
      %v872 = vsub.s32 1, %v871
      %v873 = vrot.slane %v864, %v872
      %v884 = vunpack.c.l.b16 %v856
      %v885 = vunpack.c.h.b16 %v856
      %v886 = vunpack.c.l.b16 %v857
      %v887 = vunpack.c.h.b16 %v857
      %v888 = vunpack.c.l.b16 %v858
      %v889 = vunpack.c.h.b16 %v858
      %v890 = vunpack.c.l.b16 %v859
      %v891 = vunpack.c.h.b16 %v859
      %v892 = vunpack.c.l.b16 %v860
      %v893 = vunpack.c.h.b16 %v860
      %v894 = vunpack.c.l.b16 %v861
      %v895 = vunpack.c.h.b16 %v861
      %v896 = vunpack.c.l.b16 %v862
      %v897 = vunpack.c.h.b16 %v862
      %v898 = vunpack.c.l.b16 %v863
      %v899 = vunpack.c.h.b16 %v863
      %v900 = vpack.c.b16 %v886, %v884
      %v901 = vpack.c.b16 %v887, %v885
      %v902 = vpack.c.b16 %v890, %v888
      %v903 = vpack.c.b16 %v891, %v889
      %v904 = vpack.c.b16 %v894, %v892
      %v905 = vpack.c.b16 %v895, %v893
      %v906 = vpack.c.b16 %v898, %v896
      %v907 = vpack.c.b16 %v899, %v897
      %vm916 = vcmask 523264
      %v918 = vsel %vm916, %v815, 0
      %v921 = vsel %vm916, %v816, 0
      %v924 = vsel %vm916, %v817, 0
      %v927 = vsel %vm916, %v818, 0
      %929 = vmatprep.subr.bf16.mxu0 %v901
      %930 = vmatpush1.bf16.msra.mxu0 %v900
      %931 = vmatprep.subr.bf16.mxu0 %v903
      %932 = vmatpush1.bf16.msra.mxu0 %v902
      %933 = vmatprep.subr.bf16.mxu0 %v905
      %934 = vmatpush1.bf16.msra.mxu0 %v904
      %935 = vmatprep.subr.bf16.mxu0 %v907
      %936 = vmatpush1.bf16.msra.mxu0 %v906
      %937 = vmatprep.subr.bf16.mxu0 0
      %938 = vmatpush1.bf16.msra.mxu0 0
      %939 = vmatprep.subr.bf16.mxu0 0
      %940 = vmatpush1.bf16.msra.mxu0 0
      %941 = vmatprep.subr.bf16.mxu0 0
      %942 = vmatpush1.bf16.msra.mxu0 0
      %943 = vmatprep.subr.bf16.mxu0 0
      %944 = vmatpush1.bf16.msra.mxu0 0
      %945 = vmatprep.subr.bf16.mxu0 0
      %946 = vmatpush1.bf16.msra.mxu0 0
      %947 = vmatprep.subr.bf16.mxu0 0
      %948 = vmatpush1.bf16.msra.mxu0 0
      %949 = vmatprep.subr.bf16.mxu0 0
      %950 = vmatpush1.bf16.msra.mxu0 0
      %951 = vmatprep.subr.bf16.mxu0 0
      %952 = vmatpush1.bf16.msra.mxu0 0
      %953 = vmatprep.subr.bf16.mxu0 0
      %954 = vmatpush1.bf16.msra.mxu0 0
      %955 = vmatprep.subr.bf16.mxu0 0
      %956 = vmatpush1.bf16.msra.mxu0 0
      %957 = vmatprep.subr.bf16.mxu0 0
      %958 = vmatpush1.bf16.msra.mxu0 0
      %959 = vmatprep.subr.bf16.mxu0 0
      %960 = vmatpush1.bf16.msra.mxu0 0
      %961 = vmatprep.mubr.bf16.mxu0 0
      %962 = vmatmul.mubr.bf16.gmra.mrb[0].mxu0 %v918
      %v963 = vpop.f32.mrb[0].mxu0
      %v964 = vadd.f32 %v869, %v963
      %v965 = vpop.f32.mrb[0].mxu0
      %v966 = vadd.f32 %v873, %v965
      %v967 = vpop.f32.mrb[0].mxu0
      %v968 = vadd.f32 %v869, %v967
      %v969 = vpop.f32.mrb[0].mxu0
      %v970 = vadd.f32 %v873, %v969
      %971 = vmatprep.mubr.bf16.mxu0 0
      %972 = vmatmul.mubr.bf16.gmra.mrb[0].mxu0 %v921
      %v973 = vpop.f32.mrb[0].mxu0
      %v974 = vadd.f32 %v869, %v973
      %v975 = vpop.f32.mrb[0].mxu0
      %v976 = vadd.f32 %v873, %v975
      %v977 = vpop.f32.mrb[0].mxu0
      %v978 = vadd.f32 %v869, %v977
      %v979 = vpop.f32.mrb[0].mxu0
      %v980 = vadd.f32 %v873, %v979
      %981 = vmatprep.mubr.bf16.mxu0 0
      %982 = vmatmul.mubr.bf16.gmra.mrb[0].mxu0 %v924
      %v983 = vpop.f32.mrb[0].mxu0
      %v984 = vadd.f32 %v869, %v983
      %v985 = vpop.f32.mrb[0].mxu0
      %v986 = vadd.f32 %v873, %v985
      %v987 = vpop.f32.mrb[0].mxu0
      %v988 = vadd.f32 %v869, %v987
      %v989 = vpop.f32.mrb[0].mxu0
      %v990 = vadd.f32 %v873, %v989
      %991 = vmatprep.mubr.bf16.mxu0 0
      %992 = vmatmul.mubr.bf16.gmra.mrb[0].mxu0 %v927
      %v993 = vpop.f32.mrb[0].mxu0
      %v994 = vadd.f32 %v869, %v993
      %v995 = vpop.f32.mrb[0].mxu0
      %v996 = vadd.f32 %v873, %v995
      %v997 = vpop.f32.mrb[0].mxu0
      %v998 = vadd.f32 %v869, %v997
      %v999 = vpop.f32.mrb[0].mxu0
      %v1000 = vadd.f32 %v873, %v999
      %1001 = vdwg.mxu0
      %v1002 = vmax.f32 %v964, 0.0
      %v1003 = vmax.f32 %v966, 0.0
      %v1004 = vmax.f32 %v968, 0.0
      %v1005 = vmax.f32 %v970, 0.0
      %v1006 = vmax.f32 %v974, 0.0
      %v1007 = vmax.f32 %v976, 0.0
      %v1008 = vmax.f32 %v978, 0.0
      %v1009 = vmax.f32 %v980, 0.0
      %v1010 = vmax.f32 %v984, 0.0
      %v1011 = vmax.f32 %v986, 0.0
      %v1012 = vmax.f32 %v988, 0.0
      %v1013 = vmax.f32 %v990, 0.0
      %v1014 = vmax.f32 %v994, 0.0
      %v1015 = vmax.f32 %v996, 0.0
      %v1016 = vmax.f32 %v998, 0.0
      %v1017 = vmax.f32 %v1000, 0.0
      %v1018 = vpack.c.bf16 %v1004, %v1002
      %v1019 = vpack.c.bf16 %v1005, %v1003
      %v1020 = vpack.c.bf16 %v1008, %v1006
      %v1021 = vpack.c.bf16 %v1009, %v1007
      %v1022 = vpack.c.bf16 %v1012, %v1010
      %v1023 = vpack.c.bf16 %v1013, %v1011
      %v1024 = vpack.c.bf16 %v1016, %v1014
      %v1025 = vpack.c.bf16 %v1017, %v1015
      %v1026 = vld [vmem:[%s7] sm:$0xf]
      %v1027 = vld [vmem:[%s7 + $0x4] sm:$0xf]
      %v1028 = vld [vmem:[%s7 + $0x8] sm:$0xf]
      %v1029 = vld [vmem:[%s7 + $0xc] sm:$0xf]
      %v1030 = vld [vmem:[%s7 + $0x10] sm:$0xf]
      %v1031 = vld [vmem:[%s7 + $0x14] sm:$0xf]
      %v1032 = vld [vmem:[%s7 + $0x18] sm:$0xf]
      %v1033 = vld [vmem:[%s7 + $0x1c] sm:$0xf]
      %v1034 = vld [vmem:[%s7 + $0x20] sm:$0xf]
      %v1035 = vld [vmem:[%s7 + $0x24] sm:$0xf]
      %v1036 = vld [vmem:[%s7 + $0x28] sm:$0xf]
      %v1037 = vld [vmem:[%s7 + $0x2c] sm:$0xf]
      %v1038 = vld [vmem:[%s7 + $0x30] sm:$0xf]
      %v1039 = vld [vmem:[%s7 + $0x34] sm:$0xf]
      %v1040 = vld [vmem:[%s7 + $0x38] sm:$0xf]
      %v1041 = vld [vmem:[%s7 + $0x3c] sm:$0xf]
      %v1042 = vld [vmem:[%s7 + $0x40] sm:$0xf]
      %v1043 = vld [vmem:[%s7 + $0x44] sm:$0xf]
      %v1044 = vld [vmem:[%s7 + $0x48] sm:$0xf]
      %v1045 = vld [vmem:[%s7 + $0x4c] sm:$0xf]
      %v1046 = vld [vmem:[%s7 + $0x50] sm:$0xf]
      %v1047 = vld [vmem:[%s7 + $0x54] sm:$0xf]
      %v1048 = vld [vmem:[%s7 + $0x58] sm:$0xf]
      %v1049 = vld [vmem:[%s7 + $0x5c] sm:$0xf]
      %v1050 = vld [vmem:[%s7 + $0x60] sm:$0xf]
      %v1051 = vld [vmem:[%s7 + $0x64] sm:$0xf]
      %v1052 = vld [vmem:[%s7 + $0x68] sm:$0xf]
      %v1053 = vld [vmem:[%s7 + $0x6c] sm:$0xf]
      %v1054 = vld [vmem:[%s7 + $0x70] sm:$0xf]
      %v1055 = vld [vmem:[%s7 + $0x74] sm:$0xf]
      %v1056 = vld [vmem:[%s7 + $0x78] sm:$0xf]
      %v1057 = vld [vmem:[%s7 + $0x7c] sm:$0xf]
      %v1058 = vld [vmem:[%s8] sm:$0x1]
      %v1060 = vlaneseq
      %v1061 = vshrl.u32 %v1060, 7
      %v1062 = vsub.s32 0, %v1061
      %v1063 = vrot.slane %v1058, %v1062
      %v1097 = vunpack.c.l.b16 %v1026
      %v1098 = vunpack.c.l.b16 %v1027
      %v1099 = vunpack.c.l.b16 %v1028
      %v1100 = vunpack.c.l.b16 %v1029
      %v1101 = vunpack.c.l.b16 %v1030
      %v1102 = vunpack.c.l.b16 %v1031
      %v1103 = vunpack.c.l.b16 %v1032
      %v1104 = vunpack.c.l.b16 %v1033
      %v1105 = vunpack.c.l.b16 %v1034
      %v1106 = vunpack.c.l.b16 %v1035
      %v1107 = vunpack.c.l.b16 %v1036
      %v1108 = vunpack.c.l.b16 %v1037
      %v1109 = vunpack.c.l.b16 %v1038
      %v1110 = vunpack.c.l.b16 %v1039
      %v1111 = vunpack.c.l.b16 %v1040
      %v1112 = vunpack.c.l.b16 %v1041
      %v1113 = vunpack.c.l.b16 %v1042
      %v1114 = vunpack.c.l.b16 %v1043
      %v1115 = vunpack.c.l.b16 %v1044
      %v1116 = vunpack.c.l.b16 %v1045
      %v1117 = vunpack.c.l.b16 %v1046
      %v1118 = vunpack.c.l.b16 %v1047
      %v1119 = vunpack.c.l.b16 %v1048
      %v1120 = vunpack.c.l.b16 %v1049
      %v1121 = vunpack.c.l.b16 %v1050
      %v1122 = vunpack.c.l.b16 %v1051
      %v1123 = vunpack.c.l.b16 %v1052
      %v1124 = vunpack.c.l.b16 %v1053
      %v1125 = vunpack.c.l.b16 %v1054
      %v1126 = vunpack.c.l.b16 %v1055
      %v1127 = vunpack.c.l.b16 %v1056
      %v1128 = vunpack.c.l.b16 %v1057
      %v1129 = vpack.c.b16 %v1098, %v1097
      %v1130 = vpack.c.b16 %v1100, %v1099
      %v1131 = vpack.c.b16 %v1102, %v1101
      %v1132 = vpack.c.b16 %v1104, %v1103
      %v1133 = vpack.c.b16 %v1106, %v1105
      %v1134 = vpack.c.b16 %v1108, %v1107
      %v1135 = vpack.c.b16 %v1110, %v1109
      %v1136 = vpack.c.b16 %v1112, %v1111
      %v1137 = vpack.c.b16 %v1114, %v1113
      %v1138 = vpack.c.b16 %v1116, %v1115
      %v1139 = vpack.c.b16 %v1118, %v1117
      %v1140 = vpack.c.b16 %v1120, %v1119
      %v1141 = vpack.c.b16 %v1122, %v1121
      %v1142 = vpack.c.b16 %v1124, %v1123
      %v1143 = vpack.c.b16 %v1126, %v1125
      %v1144 = vpack.c.b16 %v1128, %v1127
      %1161 = vmatprep.subr.bf16.mxu0 0
      %1162 = vmatpush1.bf16.msra.mxu0 %v1129
      %1163 = vmatprep.subr.bf16.mxu0 0
      %1164 = vmatpush1.bf16.msra.mxu0 %v1130
      %1165 = vmatprep.subr.bf16.mxu0 0
      %1166 = vmatpush1.bf16.msra.mxu0 %v1131
      %1167 = vmatprep.subr.bf16.mxu0 0
      %1168 = vmatpush1.bf16.msra.mxu0 %v1132
      %1169 = vmatprep.subr.bf16.mxu0 0
      %1170 = vmatpush1.bf16.msra.mxu0 %v1133
      %1171 = vmatprep.subr.bf16.mxu0 0
      %1172 = vmatpush1.bf16.msra.mxu0 %v1134
      %1173 = vmatprep.subr.bf16.mxu0 0
      %1174 = vmatpush1.bf16.msra.mxu0 %v1135
      %1175 = vmatprep.subr.bf16.mxu0 0
      %1176 = vmatpush1.bf16.msra.mxu0 %v1136
      %1177 = vmatprep.subr.bf16.mxu0 0
      %1178 = vmatpush1.bf16.msra.mxu0 %v1137
      %1179 = vmatprep.subr.bf16.mxu0 0
      %1180 = vmatpush1.bf16.msra.mxu0 %v1138
      %1181 = vmatprep.subr.bf16.mxu0 0
      %1182 = vmatpush1.bf16.msra.mxu0 %v1139
      %1183 = vmatprep.subr.bf16.mxu0 0
      %1184 = vmatpush1.bf16.msra.mxu0 %v1140
      %1185 = vmatprep.subr.bf16.mxu0 0
      %1186 = vmatpush1.bf16.msra.mxu0 %v1141
      %1187 = vmatprep.subr.bf16.mxu0 0
      %1188 = vmatpush1.bf16.msra.mxu0 %v1142
      %1189 = vmatprep.subr.bf16.mxu0 0
      %1190 = vmatpush1.bf16.msra.mxu0 %v1143
      %1191 = vmatprep.subr.bf16.mxu0 0
      %1192 = vmatpush1.bf16.msra.mxu0 %v1144
      %1193 = vmatprep.mubr.bf16.mxu0 %v1019
      %1194 = vmatmul.mubr.bf16.gmra.mrb[0].mxu0 %v1018
      %v1195 = vpop.f32.mrb[0].mxu0
      %v1196 = vadd.f32 %v1063, %v1195
      %v1197 = vpop.f32.mrb[0].mxu0
      %v1198 = vpop.f32.mrb[0].mxu0
      %v1199 = vadd.f32 %v1063, %v1198
      %v1200 = vpop.f32.mrb[0].mxu0
      %1201 = vmatprep.mubr.bf16.mxu0 %v1021
      %1202 = vmatmul.mubr.bf16.gmra.mrb[0].mxu0 %v1020
      %v1203 = vpop.f32.mrb[0].mxu0
      %v1204 = vadd.f32 %v1063, %v1203
      %v1205 = vpop.f32.mrb[0].mxu0
      %v1206 = vpop.f32.mrb[0].mxu0
      %v1207 = vadd.f32 %v1063, %v1206
      %v1208 = vpop.f32.mrb[0].mxu0
      %1209 = vmatprep.mubr.bf16.mxu0 %v1023
      %1210 = vmatmul.mubr.bf16.gmra.mrb[0].mxu0 %v1022
      %v1211 = vpop.f32.mrb[0].mxu0
      %v1212 = vadd.f32 %v1063, %v1211
      %v1213 = vpop.f32.mrb[0].mxu0
      %v1214 = vpop.f32.mrb[0].mxu0
      %v1215 = vadd.f32 %v1063, %v1214
      %v1216 = vpop.f32.mrb[0].mxu0
      %1217 = vmatprep.mubr.bf16.mxu0 %v1025
      %1218 = vmatmul.mubr.bf16.gmra.mrb[0].mxu0 %v1024
      %v1219 = vpop.f32.mrb[0].mxu0
      %v1220 = vadd.f32 %v1063, %v1219
      %v1221 = vpop.f32.mrb[0].mxu0
      %v1222 = vpop.f32.mrb[0].mxu0
      %v1223 = vadd.f32 %v1063, %v1222
      %v1224 = vpop.f32.mrb[0].mxu0
      %1225 = vdwg.mxu0
      %v1226 = vpack.c.bf16 %v1199, %v1196
      %v1227 = vpack.c.bf16 %v1207, %v1204
      %v1228 = vpack.c.bf16 %v1215, %v1212
      %v1229 = vpack.c.bf16 %v1223, %v1220
      %v1234 = vunpack.c.l.b16 %v1226
      %v1235 = vunpack.c.h.b16 %v1226
      %v1236 = vunpack.c.l.b16 %v1227
      %v1237 = vunpack.c.h.b16 %v1227
      %v1238 = vunpack.c.l.b16 %v1228
      %v1239 = vunpack.c.h.b16 %v1228
      %v1240 = vunpack.c.l.b16 %v1229
      %v1241 = vunpack.c.h.b16 %v1229
      %v1242 = vpack.c.b16 %v1234, %v1234
      %v1243 = vpack.c.b16 %v1235, %v1235
      %v1244 = vpack.c.b16 %v1236, %v1236
      %v1245 = vpack.c.b16 %v1237, %v1237
      %v1246 = vpack.c.b16 %v1238, %v1238
      %v1247 = vpack.c.b16 %v1239, %v1239
      %v1248 = vpack.c.b16 %v1240, %v1240
      %v1249 = vpack.c.b16 %v1241, %v1241
      %1258 = vst [vmem:[%s369] sm:$0xf] %v1242
      %1259 = vst [vmem:[%s369 + $0x4] sm:$0xf] %v1243
      %1260 = vst [vmem:[%s369 + $0x8] sm:$0xf] %v1244
      %1261 = vst [vmem:[%s369 + $0xc] sm:$0xf] %v1245
      %1262 = vst [vmem:[%s369 + $0x10] sm:$0xf] %v1246
      %1263 = vst [vmem:[%s369 + $0x14] sm:$0xf] %v1247
      %1264 = vst [vmem:[%s369 + $0x18] sm:$0xf] %v1248
      %1265 = vst [vmem:[%s369 + $0x1c] sm:$0xf] %v1249
      %s1266 = smul.u32 8, %s22
      %p1267 = scmp.lt.s32.totalorder %s1266, 23
      %s1268 = scalar_select %p1267, %s1266, 23
      %s1269 = smul.addr %s1268, 4
      %s1270 = scalar_lea.vmem %s9, %s1269
      %s1271 = smul.u32 8, %s22
      %p1272 = scmp.lt.s32.totalorder %s1271, 23
      %s1273 = scalar_select %p1272, %s1271, 23
      %s1274 = smul.addr %s1273, 4
      %s1275 = scalar_lea.vmem %s10, %s1274
      // Predicated region
      $region57: #{ae_forward.1} parent=55 // pred_check
        %p1276 = pneg %p234
      $region58: #{ae_forward.1} parent=55 // pred_check_branch
        %1278 = sbr.rel (%p1276) target = $region60
      $region59: #{ae_forward.1} parent=55 // pred_region
        %s1279 = smul.u32 8, %s22
      $region60: #{ae_forward.1} parent=55 // pred_fallthru
        _
      // Predicated region
      $region61: #{ae_forward.1} parent=55 // pred_check
        %p1280 = pneg %p260
      $region62: #{ae_forward.1} parent=55 // pred_check_branch
        %1282 = sbr.rel (%p1280) target = $region64
      $region63: #{ae_forward.1} parent=55 // pred_region
        %s1283 = smul.u32 8, %s22
      $region64: #{ae_forward.1} parent=55 // pred_fallthru
        _
    $region56: #{ae_forward.1} parent=5 // pred_fallthru
      _
    %p1284 = scmp.le.s32.totalorder 2, %s17
    // Predicated region
    $region65: #{ae_forward.1} parent=5 // pred_check
      %p1285 = pneg %p1284
    $region66: #{ae_forward.1} parent=5 // pred_check_branch
      %1287 = sbr.rel (%p1285) target = $region68
    $region67: #{ae_forward.1} parent=5 // pred_region
      %s1288 = ssub.s32 %s17, 2
      // Predicated region
      $region69: #{ae_forward.1} parent=67 // pred_check
        %p1289 = pneg %p240
      $region70: #{ae_forward.1} parent=67 // pred_check_branch
        %1291 = sbr.rel (%p1289) target = $region72
      $region71: #{ae_forward.1} parent=67 // pred_region
        %s1292 = smul.u32 8, %s23
        %p1293 = scmp.lt.s32.totalorder %s1292, 23
        %s1294 = scalar_select %p1293, %s1292, 23
        %s1295 = smul.addr %s1294, 4
        %s1296 = scalar_lea.vmem %s9, %s1295
      $region72: #{ae_forward.1} parent=67 // pred_fallthru
        _
      // Predicated region
      $region73: #{ae_forward.1} parent=67 // pred_check
        %p1297 = pneg %p266
      $region74: #{ae_forward.1} parent=67 // pred_check_branch
        %1299 = sbr.rel (%p1297) target = $region76
      $region75: #{ae_forward.1} parent=67 // pred_region
        %s1300 = smul.u32 8, %s23
        %p1301 = scmp.lt.s32.totalorder %s1300, 23
        %s1302 = scalar_select %p1301, %s1300, 23
        %s1303 = smul.addr %s1302, 4
        %s1304 = scalar_lea.vmem %s10, %s1303
      $region76: #{ae_forward.1} parent=67 // pred_fallthru
        _
    $region68: #{ae_forward.1} parent=5 // pred_fallthru
      _
  $region6: #{ae_forward.1} parent=0 // loop_footer
    %s21 = sadd.s32 1, %s17
  $region7: #{ae_forward.1} parent=0 // loop_footer_branch
    %16 = sbr.rel target = $region3
  $region8: #{ae_forward.1} parent=0 // loop_exit
    _

</llo_original>
